<compile_context>
chip_gen: v7x
topology: tpu7x:2x2x1
jax: 0.10.0
libtpu: 0.0.40
codegen_flags: <defaults>
</compile_context>

<pallas_src>
import jax
import jax.numpy as jnp
from jax import lax
from jax.experimental import pallas as pl
from jax.experimental.pallas import tpu as pltpu
import numpy as np

_LN_EPS = 1e-5   # nn.LayerNorm default eps


# ----------------------------------------------------------------------------
# Pallas kernel: fused patch-projection matmul + bias + LayerNorm + NCHW store.
# ----------------------------------------------------------------------------
def _patch_embed_kernel(x_ref, w_ref, p_ref, o_ref):
    # x_ref: (1, TM, K)  bf16 flattened patch rows of one image
    # w_ref: (K, D)      bf16 projection weight (resident; constant index map)
    # p_ref: (3, D)      f32  rows = [conv bias, LN gamma, LN beta]
    # o_ref: (1, D, TM)  bf16 output, channels-major so NCHW is a free reshape
    y = jnp.dot(x_ref[0], w_ref[...],
                preferred_element_type=jnp.float32)        # MXU, f32 accum
    p = p_ref[...]
    y = y + p[0:1, :]                                      # conv bias

    # LayerNorm over the channel (lane) dimension, f32 math.
    mean = jnp.mean(y, axis=-1, keepdims=True)
    yc = y - mean
    var = jnp.mean(yc * yc, axis=-1, keepdims=True)
    inv = lax.rsqrt(var + _LN_EPS)                         # EUP rsqrt
    y = yc * inv * p[1:2, :] + p[2:3, :]

    # (TM, D) -> (D, TM) on the XLU so the store lands directly in NCHW order.
    o_ref[0, :, :] = jnp.transpose(y).astype(o_ref.dtype)


def _pick_row_tile(n_rows, k, d, batch):
    """Pick TM (patch rows per grid step) for the per-image row axis (N)."""
    budget = 16 << 20   # double-buffered streaming bytes; ample v7x headroom

    def fits(tm):
        return 2 * tm * k * 2 + 2 * tm * d * 2 <= budget   # bf16 in + bf16 out

    # Small per-image problems: a single full-extent block beats several tiny
    # grid steps (per-step overhead ~0.35 us).
    if n_rows <= 1024 and fits(n_rows):
        return n_rows
    # Prefer TM multiple of 128 (lane-dense (1, D, TM) stores), keep >= 4
    # total grid steps so v7x megacore sharding + double buffering engage.
    for tm in (2048, 1024, 512, 256, 128):
        if n_rows % tm == 0 and fits(tm) and batch * (n_rows // tm) >= 4:
            return tm
    # Fall back to bf16 sublane-packed tiles (multiple of 16, never 8).
    for tm in range(1024, 15, -16):
        if n_rows % tm == 0 and fits(tm):
            return tm
    return min(n_rows, 1024)   # non-divisible fallback: pl.cdiv + masked tail


# ----------------------------------------------------------------------------
# Wrapper
# ----------------------------------------------------------------------------
def patch_embed_forward(x_nchw, params, patch_size, out_dtype=jnp.bfloat16):
    B, Cin, H, W = x_nchw.shape
    P = patch_size
    assert H % P == 0 and W % P == 0
    Hp, Wp = H // P, W // P
    N = Hp * Wp
    D = params["proj_w"].shape[0]
    K = Cin * P * P

    # --- input layout plumbing ---------------------------------------------
    # Non-overlapping PxP patches flattened in (cin, ph, pw) order to match the
    # Conv2d weight layout (D, Cin, P, P).  allow_input_fusion lets XLA fuse
    # this reshape/transpose/cast into the pallas_call operand, avoiding a
    # separate HBM round trip for the patchified input.
    patches = x_nchw.reshape(B, Cin, Hp, P, Wp, P)
    patches = patches.transpose(0, 2, 4, 1, 3, 5).reshape(B, N, K)
    patches = patches.astype(jnp.bfloat16)

    w = params["proj_w"].reshape(D, K).T.astype(jnp.bfloat16)          # (K, D)
    p_packed = jnp.stack(
        [params["proj_b"], params["ln_g"], params["ln_b"]], axis=0
    ).astype(jnp.float32)                                              # (3, D)

    TM = _pick_row_tile(N, K, D, B)
    grid = (B, pl.cdiv(N, TM))

    # Explicit VMEM budget (v7x: 64 MiB physical / 32 MiB scoped default;
    # v5e scoped default is only 16 MiB, so raise it when tiles are large).
    vmem_needed = (2 * TM * K * 2      # double-buffered bf16 patch tiles
                   + 2 * D * TM * 2    # double-buffered bf16 output tiles
                   + 2 * K * D * 2     # bf16 weight (double buffered)
                   + 2 * 8 * D * 4)    # packed params (sublane-padded)
    vmem_limit = int(min(48 << 20, max(32 << 20, 2 * vmem_needed)))

    out = pl.pallas_call(
        _patch_embed_kernel,
        out_shape=jax.ShapeDtypeStruct((B, D, N), out_dtype),
        grid_spec=pltpu.PrefetchScalarGridSpec(
            num_scalar_prefetch=0,
            grid=grid,
            in_specs=[
                pl.BlockSpec((1, TM, K), lambda b, i: (b, i, 0)),   # patches
                pl.BlockSpec((K, D), lambda b, i: (0, 0)),          # weight
                pl.BlockSpec((3, D), lambda b, i: (0, 0)),          # bias/gamma/beta
            ],
            out_specs=pl.BlockSpec((1, D, TM), lambda b, i: (b, 0, i)),
        ),
        compiler_params=pltpu.CompilerParams(
            dimension_semantics=("parallel", "parallel"),
            vmem_limit_bytes=vmem_limit,
            allow_input_fusion=[True, False, False],
        ),
    )(patches, w, p_packed)

    # (B, D, N) is already channels-major: NCHW is a free reshape, no transpose.
    return out.reshape(B, D, Hp, Wp)


# ----------------------------------------------------------------------------
# Pure-JAX reference (for validation)
# ----------------------------------------------------------------------------
def ref_forward(x_nchw, params, patch_size):
    P = patch_size
    B, Cin, H, W = x_nchw.shape
    D = params["proj_w"].shape[0]
    y = lax.conv_general_dilated(
        x_nchw.astype(jnp.float32), params["proj_w"].astype(jnp.float32),
        window_strides=(P, P), padding="VALID",
        dimension_numbers=("NCHW", "OIHW", "NCHW"),
        precision=lax.Precision.HIGHEST)
    y = y + params["proj_b"].reshape(1, D, 1, 1)
    Hp, Wp = y.shape[2], y.shape[3]
    t = y.reshape(B, D, Hp * Wp).transpose(0, 2, 1)          # (B, N, D)
    mean = t.mean(-1, keepdims=True)
    var = ((t - mean) ** 2).mean(-1, keepdims=True)
    t = (t - mean) / jnp.sqrt(var + _LN_EPS)
    t = t * params["ln_g"] + params["ln_b"]
    return t.reshape(B, Hp, Wp, D).transpose(0, 3, 1, 2)


# ----------------------------------------------------------------------------
# Deterministic parameter init (shapes follow PatchEmbed.__init__)
# ----------------------------------------------------------------------------
def init_params(key, in_chans, patch_size, embed_dim):
    ks = jax.random.split(key, 4)

    def n(k, shape, scale=0.2):
        return jax.random.normal(k, shape, jnp.float32) * scale

    return {
        "proj_w": n(ks[0], (embed_dim, in_chans, patch_size, patch_size)),
        "proj_b": n(ks[1], (embed_dim,)),
        "ln_g": 1.0 + n(ks[2], (embed_dim,), 0.1),
        "ln_b": n(ks[3], (embed_dim,), 0.1),
    }


if __name__ == "__main__":
    # Small shapes consistent with the module: B=2, in_chans=3, img=32,
    # patch=8, embed_dim=128 (lane-dense channel dim).
    B, Cin, IMG, P, D = 2, 3, 32, 8, 128
    key = jax.random.PRNGKey(0)
    kx, kp = jax.random.split(key)

    x = jax.random.normal(kx, (B, Cin, IMG, IMG), jnp.float32)   # NCHW
    params = init_params(kp, Cin, P, D)

    fwd = jax.jit(patch_embed_forward, static_argnums=(2,))
    out = jax.block_until_ready(fwd(x, params, P))
    ref = jax.block_until_ready(ref_forward(x, params, P))

    assert out.shape == (B, D, IMG // P, IMG // P)
    # Kernel uses bf16 MXU inputs (f32 accumulation) and bf16 output;
    # tolerance reflects that.
    np.testing.assert_allclose(
        np.asarray(out.astype(jnp.float32)), np.asarray(ref),
        rtol=3e-2, atol=3e-2)

    print("KERNEL_OK")
</pallas_src>

<mosaic_0001>
module attributes {stable_mosaic.version = 11 : i64} {
  func.func @_patch_embed_kernel(%arg0: i32, %arg1: i32, %arg2: memref<1x16x192xbf16, #tpu.memory_space<vmem>>, %arg3: memref<192x128xbf16, #tpu.memory_space<vmem>>, %arg4: memref<3x128xf32, #tpu.memory_space<vmem>>, %arg5: memref<1x128x16xbf16, #tpu.memory_space<vmem>>) attributes {dimension_semantics = [#tpu.dimension_semantics<parallel>, #tpu.dimension_semantics<parallel>], iteration_bounds = array<i64: 2, 1>, scalar_prefetch = 0 : i64, scratch_operands = 0 : i64, tpu.core_type = #tpu.core_type<tc>, window_params = [{transform_indices = @transform_0, window_bounds = array<i64: 1, 16, 192>}, {pipeline_mode = #tpu.pipeline_mode<synchronous>, transform_indices = @transform_1, window_bounds = array<i64: 192, 128>}, {pipeline_mode = #tpu.pipeline_mode<synchronous>, transform_indices = @transform_2, window_bounds = array<i64: 3, 128>}, {transform_indices = @transform_3, window_bounds = array<i64: 1, 128, 16>}]} {
    %c0 = arith.constant 0 : index
    %c0_0 = arith.constant 0 : index
    %c0_1 = arith.constant 0 : index
    %0 = vector.load %arg2[%c0, %c0_0, %c0_1] : memref<1x16x192xbf16, #tpu.memory_space<vmem>>, vector<1x16x192xbf16>
    %1 = vector.shape_cast %0 : vector<1x16x192xbf16> to vector<16x192xbf16>
    %c0_2 = arith.constant 0 : index
    %c0_3 = arith.constant 0 : index
    %2 = vector.load %arg3[%c0_2, %c0_3] : memref<192x128xbf16, #tpu.memory_space<vmem>>, vector<192x128xbf16>
    %cst = arith.constant dense<0.000000e+00> : vector<16x128xf32>
    %3 = tpu.matmul %1, %2, %cst {dimension_numbers = #tpu.dot_dimension_numbers<[1], [0], [0], [1], [0, 0, 1, 1], [], []>} : vector<16x192xbf16>, vector<192x128xbf16>, vector<16x128xf32> -> vector<16x128xf32>
    %c0_4 = arith.constant 0 : index
    %c0_5 = arith.constant 0 : index
    %4 = vector.load %arg4[%c0_4, %c0_5] : memref<3x128xf32, #tpu.memory_space<vmem>>, vector<3x128xf32>
    %5 = vector.extract_strided_slice %4 {offsets = [0, 0], sizes = [1, 128], strides = [1, 1]} : vector<3x128xf32> to vector<1x128xf32>
    %6 = vector.broadcast %5 : vector<1x128xf32> to vector<16x128xf32>
    %7 = arith.addf %3, %6 : vector<16x128xf32>
    %cst_6 = arith.constant dense<0.000000e+00> : vector<16xf32>
    %8 = vector.multi_reduction <add>, %7, %cst_6 [1] : vector<16x128xf32> to vector<16xf32>
    %9 = vector.shape_cast %8 : vector<16xf32> to vector<16x1xf32>
    %cst_7 = arith.constant 1.280000e+02 : f32
    %10 = vector.broadcast %cst_7 : f32 to vector<16x1xf32>
    %11 = arith.divf %9, %10 : vector<16x1xf32>
    %12 = vector.broadcast %11 : vector<16x1xf32> to vector<16x128xf32>
    %13 = arith.subf %7, %12 : vector<16x128xf32>
    %14 = arith.mulf %13, %13 : vector<16x128xf32>
    %cst_8 = arith.constant dense<0.000000e+00> : vector<16xf32>
    %15 = vector.multi_reduction <add>, %14, %cst_8 [1] : vector<16x128xf32> to vector<16xf32>
    %16 = vector.shape_cast %15 : vector<16xf32> to vector<16x1xf32>
    %cst_9 = arith.constant 1.280000e+02 : f32
    %17 = vector.broadcast %cst_9 : f32 to vector<16x1xf32>
    %18 = arith.divf %16, %17 : vector<16x1xf32>
    %cst_10 = arith.constant 9.99999974E-6 : f32
    %19 = vector.broadcast %cst_10 : f32 to vector<16x1xf32>
    %20 = arith.addf %18, %19 : vector<16x1xf32>
    %21 = math.rsqrt %20 : vector<16x1xf32>
    %22 = vector.broadcast %21 : vector<16x1xf32> to vector<16x128xf32>
    %23 = arith.mulf %13, %22 : vector<16x128xf32>
    %24 = vector.extract_strided_slice %4 {offsets = [1, 0], sizes = [1, 128], strides = [1, 1]} : vector<3x128xf32> to vector<1x128xf32>
    %25 = vector.broadcast %24 : vector<1x128xf32> to vector<16x128xf32>
    %26 = arith.mulf %23, %25 : vector<16x128xf32>
    %27 = vector.extract_strided_slice %4 {offsets = [2, 0], sizes = [1, 128], strides = [1, 1]} : vector<3x128xf32> to vector<1x128xf32>
    %28 = vector.broadcast %27 : vector<1x128xf32> to vector<16x128xf32>
    %29 = arith.addf %26, %28 : vector<16x128xf32>
    %30 = tpu.transpose %29, [1, 0] : vector<16x128xf32> -> vector<128x16xf32>
    %31 = arith.truncf %30 : vector<128x16xf32> to vector<128x16xbf16>
    %c0_11 = arith.constant 0 : index
    %c0_12 = arith.constant 0 : index
    %c0_13 = arith.constant 0 : index
    %32 = vector.load %arg5[%c0_11, %c0_12, %c0_13] : memref<1x128x16xbf16, #tpu.memory_space<vmem>>, vector<1x128x16xbf16>
    %33 = vector.shape_cast %32 : vector<1x128x16xbf16> to vector<128x16xbf16>
    %34 = vector.shape_cast %31 : vector<128x16xbf16> to vector<1x128x16xbf16>
    tpu.vector_store %arg5[%c0_11, %c0_12, %c0_13], %34 {strides = array<i32>} : memref<1x128x16xbf16, #tpu.memory_space<vmem>>, vector<1x128x16xbf16>,
    return
  }
  func.func @transform_0(%arg0: i32, %arg1: i32) -> (i32, i32, i32) {
    %c0_i32 = arith.constant 0 : i32
    %c0_i32_0 = arith.constant 0 : i32
    return %arg0, %arg1, %c0_i32 : i32, i32, i32
  }
  func.func @transform_1(%arg0: i32, %arg1: i32) -> (i32, i32) {
    %c0_i32 = arith.constant 0 : i32
    %c0_i32_0 = arith.constant 0 : i32
    %c0_i32_1 = arith.constant 0 : i32
    return %c0_i32, %c0_i32_0 : i32, i32
  }
  func.func @transform_2(%arg0: i32, %arg1: i32) -> (i32, i32) {
    %c0_i32 = arith.constant 0 : i32
    %c0_i32_0 = arith.constant 0 : i32
    %c0_i32_1 = arith.constant 0 : i32
    return %c0_i32, %c0_i32_0 : i32, i32
  }
  func.func @transform_3(%arg0: i32, %arg1: i32) -> (i32, i32, i32) {
    %c0_i32 = arith.constant 0 : i32
    %c0_i32_0 = arith.constant 0 : i32
    return %arg0, %c0_i32, %arg1 : i32, i32, i32
  }
}

</mosaic_0001>

<llo_original>
// kernel: patch_embed_forward.1
$region0: #{patch_embed_forward.1}
  #allocation0 [shape = 'u32[]', space=smem, size = 0x4, offset = 0x4, fixed_abs, tag = 'smem constant byte address 0x4 - core index']
  #allocation1 [shape = 'u32[144,128]{1,0:T(1,128)}', space=vmem, size = 0x12000, scoped, tag = 'internal scratch']
  %s0 = inlined_call_operand.vmem [shape: bf16[2,16,192], index: 0, kind: input, shape index: {}]
  %s1 = inlined_call_operand.vmem [shape: bf16[192,128], index: 1, kind: input, shape index: {}]
  %s2 = inlined_call_operand.vmem [shape: f32[3,128], index: 2, kind: input, shape index: {}]
  %s3 = inlined_call_operand.vmem [shape: bf16[2,128,16], index: 3, kind: output, shape index: {}]
  %s4 = sld [smem:[#allocation0]]
  $region45: #{patch_embed_forward.1} parent=0
    _
  %s6 = ssub.s32 1, %s4
  %s7 = scalar_select 0, %s6, %s4
  loop: start=0, step=1, limit=4
  $region2: #{patch_embed_forward.1} parent=0 // loop_pre_header
    _
  $region3: #{patch_embed_forward.1} parent=0 // loop_header
    %s9 = sphi 0, %s13
    %p10 = scmp.ge.s32.totalorder %s9, 4
    %s16 = sphi 0, %s28
    %s17 = sphi 0, %s24
    %s18 = sphi 0, %s16
    %s19 = sphi 0, %s17
    %s20 = sphi 0, %s18
    %s21 = sphi 0, %s19
    %s33 = sphi 0, %s35
    %s36 = sphi 0, %s33
    %s37 = sphi 0, %s36
    %s53 = sphi 0, %s37
    %s57 = sphi 0, %s57
    %s59 = sphi 0, %s57
    %s60 = sphi 0, %s59
    %s74 = sphi 0, %s60
    %s78 = sphi 0, %s78
    %s80 = sphi 0, %s78
    %s81 = sphi 0, %s80
    %s95 = sphi 0, %s81
    %s103 = sphi 0, %s105
    %s106 = sphi 0, %s103
    %s107 = sphi 0, %s106
    %s123 = sphi 0, %s107
  $region4: #{patch_embed_forward.1} parent=0 // loop_header_branch
    %12 = sbr.rel (%p10) target = $region8
  $region5: #{patch_embed_forward.1} parent=0 // loop_body
    %s14 = ssub.s32 %s9, 1
    %s15 = ssub.s32 %s9, 2
    %s22 = sadd.s32 1, %s17
    %p23 = scmp.ge.s32.totalorder %s22, 1
    %s24 = scalar_select %p23, 0, %s22
    %s25 = sadd.s32 1, %s16
    %s26 = scalar_select %p23, %s25, %s16
    %p27 = scmp.ge.s32.totalorder %s26, 2
    %s28 = scalar_select %p27, 0, %s26
    %s29 = ssub.s32 %s16, %s28
    %s30 = ssub.s32 %s17, %s24
    %s31 = sor.u32 %s29, %s30
    %p32 = scmp.eq.s32.totalorder %s31, 0
    %s34 = sadd.s32 %s33, 1
    %s35 = scalar_select %p32, %s33, %s34
    %p38 = pneg %p32
    %p39 = scmp.eq.s32.totalorder %s9, 1
    %p40 = por %p38, %p39
    %p41 = scmp.ne.s32.totalorder %s33, %s36
    %p42 = scmp.eq.s32.totalorder %s9, 0
    %p43 = por %p41, %p42
    %p44 = scmp.ne.s32.totalorder %s33, %s36
    %p45 = scmp.eq.s32.totalorder %s14, 1
    %p46 = por %p44, %p45
    %p47 = scmp.ne.s32.totalorder %s36, %s37
    %p48 = scmp.eq.s32.totalorder %s14, 0
    %p49 = por %p47, %p48
    %p50 = scmp.ne.s32.totalorder %s36, %s37
    %p51 = scmp.eq.s32.totalorder %s15, 1
    %p52 = por %p50, %p51
    %p54 = scmp.ne.s32.totalorder %s37, %s53
    %p55 = scmp.eq.s32.totalorder %s15, 0
    %p56 = por %p54, %p55
    %s58 = sadd.s32 %s57, 1
    %p61 = scmp.eq.s32.totalorder %s9, 1
    %p62 = scmp.ne.s32.totalorder %s57, %s59
    %p63 = scmp.eq.s32.totalorder %s9, 0
    %p64 = por %p62, %p63
    %p65 = scmp.ne.s32.totalorder %s57, %s59
    %p66 = scmp.eq.s32.totalorder %s14, 1
    %p67 = por %p65, %p66
    %p68 = scmp.ne.s32.totalorder %s59, %s60
    %p69 = scmp.eq.s32.totalorder %s14, 0
    %p70 = por %p68, %p69
    %p71 = scmp.ne.s32.totalorder %s59, %s60
    %p72 = scmp.eq.s32.totalorder %s15, 1
    %p73 = por %p71, %p72
    %p75 = scmp.ne.s32.totalorder %s60, %s74
    %p76 = scmp.eq.s32.totalorder %s15, 0
    %p77 = por %p75, %p76
    %s79 = sadd.s32 %s78, 1
    %p82 = scmp.eq.s32.totalorder %s9, 1
    %p83 = scmp.ne.s32.totalorder %s78, %s80
    %p84 = scmp.eq.s32.totalorder %s9, 0
    %p85 = por %p83, %p84
    %p86 = scmp.ne.s32.totalorder %s78, %s80
    %p87 = scmp.eq.s32.totalorder %s14, 1
    %p88 = por %p86, %p87
    %p89 = scmp.ne.s32.totalorder %s80, %s81
    %p90 = scmp.eq.s32.totalorder %s14, 0
    %p91 = por %p89, %p90
    %p92 = scmp.ne.s32.totalorder %s80, %s81
    %p93 = scmp.eq.s32.totalorder %s15, 1
    %p94 = por %p92, %p93
    %p96 = scmp.ne.s32.totalorder %s81, %s95
    %p97 = scmp.eq.s32.totalorder %s15, 0
    %p98 = por %p96, %p97
    %s99 = ssub.s32 %s16, %s28
    %s100 = ssub.s32 %s17, %s24
    %s101 = sor.u32 %s99, %s100
    %p102 = scmp.eq.s32.totalorder %s101, 0
    %s104 = sadd.s32 %s103, 1
    %s105 = scalar_select %p102, %s103, %s104
    %p108 = pneg %p102
    %p109 = scmp.eq.s32.totalorder %s9, 1
    %p110 = por %p108, %p109
    %p111 = scmp.ne.s32.totalorder %s103, %s106
    %p112 = scmp.eq.s32.totalorder %s9, 0
    %p113 = por %p111, %p112
    %p114 = scmp.ne.s32.totalorder %s103, %s106
    %p115 = scmp.eq.s32.totalorder %s14, 1
    %p116 = por %p114, %p115
    %p117 = scmp.ne.s32.totalorder %s106, %s107
    %p118 = scmp.eq.s32.totalorder %s14, 0
    %p119 = por %p117, %p118
    %p120 = scmp.ne.s32.totalorder %s106, %s107
    %p121 = scmp.eq.s32.totalorder %s15, 1
    %p122 = por %p120, %p121
    %p124 = scmp.ne.s32.totalorder %s107, %s123
    %p125 = scmp.eq.s32.totalorder %s15, 0
    %p126 = por %p124, %p125
    %p127 = scmp.le.s32.totalorder 1, %s9
    %p128 = scmp.lt.s32.totalorder %s9, 3
    %p129 = pnand %p127, %p128
    %p130 = pneg %p129
    // Predicated region
    $region9: #{patch_embed_forward.1} parent=5 // pred_check
      _
    $region10: #{patch_embed_forward.1} parent=5 // pred_check_branch
      %132 = sbr.rel (%p129) target = $region12
    $region11: #{patch_embed_forward.1} parent=5 // pred_region
      %s133 = ssub.s32 %s9, 1
      // Predicated region
      $region13: #{patch_embed_forward.1} parent=11 // pred_check
        %p134 = pneg %p70
      $region14: #{patch_embed_forward.1} parent=11 // pred_check_branch
        %136 = sbr.rel (%p134) target = $region16
      $region15: #{patch_embed_forward.1} parent=11 // pred_region
        _
      $region16: #{patch_embed_forward.1} parent=11 // pred_fallthru
        _
      // Predicated region
      $region17: #{patch_embed_forward.1} parent=11 // pred_check
        %p137 = pneg %p91
      $region18: #{patch_embed_forward.1} parent=11 // pred_check_branch
        %139 = sbr.rel (%p137) target = $region20
      $region19: #{patch_embed_forward.1} parent=11 // pred_region
        _
      $region20: #{patch_embed_forward.1} parent=11 // pred_fallthru
        _
    $region12: #{patch_embed_forward.1} parent=5 // pred_fallthru
      _
    %p140 = scmp.lt.s32.totalorder %s9, 2
    // Predicated region
    $region21: #{patch_embed_forward.1} parent=5 // pred_check
      %p141 = pneg %p140
    $region22: #{patch_embed_forward.1} parent=5 // pred_check_branch
      %143 = sbr.rel (%p141) target = $region24
    $region23: #{patch_embed_forward.1} parent=5 // pred_region
      // Predicated region
      $region25: #{patch_embed_forward.1} parent=23 // pred_check
        %p144 = pneg %p43
      $region26: #{patch_embed_forward.1} parent=23 // pred_check_branch
        %146 = sbr.rel (%p144) target = $region28
      $region27: #{patch_embed_forward.1} parent=23 // pred_region
        %s147 = smul.u32 2, %s17
        %p148 = scmp.lt.s32.totalorder %s16, 1
        %s149 = scalar_select %p148, %s16, 1
        %p150 = scmp.lt.s32.totalorder %s147, 1
        %s151 = scalar_select %p150, %s147, 1
        %s152 = smul.addr %s151, 2
        %s153 = smul.addr %s149, 4
        %s154 = sadd.s32 %s152, %s153
        %s155 = smul.addr %s154, 4
        %s156 = scalar_lea.vmem %s0, %s155
        %s157 = smul.u32 2, %s17
      $region28: #{patch_embed_forward.1} parent=23 // pred_fallthru
        _
    $region24: #{patch_embed_forward.1} parent=5 // pred_fallthru
      _
    %p158 = scmp.le.s32.totalorder 1, %s9
    %p159 = scmp.lt.s32.totalorder %s9, 3
    %p160 = pnand %p158, %p159
    %p161 = pneg %p160
    // Predicated region
    $region29: #{patch_embed_forward.1} parent=5 // pred_check
      _
    $region30: #{patch_embed_forward.1} parent=5 // pred_check_branch
      %163 = sbr.rel (%p160) target = $region32
    $region31: #{patch_embed_forward.1} parent=5 // pred_region
      %s164 = ssub.s32 %s9, 1
      %s165 = smul.u32 2, %s19
      %p166 = scmp.lt.s32.totalorder %s18, 1
      %s167 = scalar_select %p166, %s18, 1
      %p168 = scmp.lt.s32.totalorder %s165, 1
      %s169 = scalar_select %p168, %s165, 1
      %s170 = smul.addr %s169, 2
      %s171 = smul.addr %s167, 4
      %s172 = sadd.s32 %s170, %s171
      %s173 = smul.addr %s172, 4
      %s174 = scalar_lea.vmem %s0, %s173
      %p175 = pneg %p49
      %p176 = pneg %p46
      %p177 = pneg %p70
      %p178 = pneg %p67
      %p179 = pneg %p91
      %p180 = pneg %p88
      %p181 = pneg %p119
      %p182 = pneg %p116
      %p183 = scmp.lt.s32.totalorder %s18, 1
      %s184 = scalar_select %p183, %s18, 1
      %p185 = scmp.lt.s32.totalorder %s19, 0
      %s186 = scalar_select %p185, %s19, 0
      %s187 = smul.addr %s184, 16
      %s188 = sadd.s32 %s186, %s187
      %s189 = smul.addr %s188, 4
      %s190 = scalar_lea.vmem %s3, %s189
      %s191 = smul.u32 2, %s19
      %p192 = scmp.lt.s32.totalorder %s18, 1
      %s193 = scalar_select %p192, %s18, 1
      %p194 = scmp.lt.s32.totalorder %s191, 1
      %s195 = scalar_select %p194, %s191, 1
      %s196 = smul.addr %s195, 2
      %s197 = smul.addr %s193, 4
      %s198 = sadd.s32 %s196, %s197
      %s199 = smul.addr %s198, 4
      %s200 = scalar_lea.vmem %s0, %s199
      %s201 = smul.u32 2, %s19
      %p202 = scmp.lt.s32.totalorder %s18, 1
      %s203 = scalar_select %p202, %s18, 1
      %p204 = scmp.lt.s32.totalorder %s19, 0
      %s205 = scalar_select %p204, %s19, 0
      %s206 = smul.addr %s203, 16
      %s207 = sadd.s32 %s205, %s206
      %s208 = smul.addr %s207, 4
      %s209 = scalar_lea.vmem %s3, %s208
      %v211 = vld [vmem:[%s200] sm:$0xff]
      %v212 = vld [vmem:[%s200 + $0x8] sm:$0xff]
      %v213 = vld [vmem:[%s1] sm:$0xf]
      %v214 = vld [vmem:[%s1 + $0x4] sm:$0xf]
      %v215 = vld [vmem:[%s1 + $0x8] sm:$0xf]
      %v216 = vld [vmem:[%s1 + $0xc] sm:$0xf]
      %v217 = vld [vmem:[%s1 + $0x10] sm:$0xf]
      %v218 = vld [vmem:[%s1 + $0x14] sm:$0xf]
      %v219 = vld [vmem:[%s1 + $0x18] sm:$0xf]
      %v220 = vld [vmem:[%s1 + $0x1c] sm:$0xf]
      %v221 = vld [vmem:[%s1 + $0x20] sm:$0xf]
      %v222 = vld [vmem:[%s1 + $0x24] sm:$0xf]
      %v223 = vld [vmem:[%s1 + $0x28] sm:$0xf]
      %v224 = vld [vmem:[%s1 + $0x2c] sm:$0xf]
      %v225 = vld [vmem:[%s1 + $0x30] sm:$0xf]
      %v226 = vld [vmem:[%s1 + $0x34] sm:$0xf]
      %v227 = vld [vmem:[%s1 + $0x38] sm:$0xf]
      %v228 = vld [vmem:[%s1 + $0x3c] sm:$0xf]
      %v229 = vld [vmem:[%s1 + $0x40] sm:$0xf]
      %v230 = vld [vmem:[%s1 + $0x44] sm:$0xf]
      %v231 = vld [vmem:[%s1 + $0x48] sm:$0xf]
      %v232 = vld [vmem:[%s1 + $0x4c] sm:$0xf]
      %v233 = vld [vmem:[%s1 + $0x50] sm:$0xf]
      %v234 = vld [vmem:[%s1 + $0x54] sm:$0xf]
      %v235 = vld [vmem:[%s1 + $0x58] sm:$0xf]
      %v236 = vld [vmem:[%s1 + $0x5c] sm:$0xf]
      %v237 = vld [vmem:[%s2] sm:$0x7]
      %v238 = vlaneseq
      %v239 = vshrl.u32 %v238, 7
      %v240 = vsub.s32 0, %v239
      %v241 = vrot.slane %v237, %v240
      %v244 = vunpack.c.l.b16 %v211
      %v245 = vunpack.c.h.b16 %v211
      %v246 = vunpack.c.l.b16 %v212
      %v247 = vunpack.c.h.b16 %v212
      %v248 = vpack.c.b16 %v246, %v244
      %v249 = vpack.c.b16 %v247, %v245
      %v275 = vunpack.c.l.b16 %v213
      %v276 = vunpack.c.l.b16 %v214
      %v277 = vunpack.c.l.b16 %v215
      %v278 = vunpack.c.l.b16 %v216
      %v279 = vunpack.c.l.b16 %v217
      %v280 = vunpack.c.l.b16 %v218
      %v281 = vunpack.c.l.b16 %v219
      %v282 = vunpack.c.l.b16 %v220
      %v283 = vunpack.c.l.b16 %v221
      %v284 = vunpack.c.l.b16 %v222
      %v285 = vunpack.c.l.b16 %v223
      %v286 = vunpack.c.l.b16 %v224
      %v287 = vunpack.c.l.b16 %v225
      %v288 = vunpack.c.l.b16 %v226
      %v289 = vunpack.c.l.b16 %v227
      %v290 = vunpack.c.l.b16 %v228
      %v291 = vunpack.c.l.b16 %v229
      %v292 = vunpack.c.l.b16 %v230
      %v293 = vunpack.c.l.b16 %v231
      %v294 = vunpack.c.l.b16 %v232
      %v295 = vunpack.c.l.b16 %v233
      %v296 = vunpack.c.l.b16 %v234
      %v297 = vunpack.c.l.b16 %v235
      %v298 = vunpack.c.l.b16 %v236
      %v299 = vpack.c.b16 %v276, %v275
      %v300 = vpack.c.b16 %v278, %v277
      %v301 = vpack.c.b16 %v280, %v279
      %v302 = vpack.c.b16 %v282, %v281
      %v303 = vpack.c.b16 %v284, %v283
      %v304 = vpack.c.b16 %v286, %v285
      %v305 = vpack.c.b16 %v288, %v287
      %v306 = vpack.c.b16 %v290, %v289
      %v307 = vpack.c.b16 %v292, %v291
      %v308 = vpack.c.b16 %v294, %v293
      %v309 = vpack.c.b16 %v296, %v295
      %v310 = vpack.c.b16 %v298, %v297
      %vm323 = vcmask 523264
      %v325 = vsel %vm323, %v249, 0
      %327 = vmatprep.subr.bf16.mxu0 0
      %328 = vmatpush1.bf16.msra.mxu0 %v299
      %329 = vmatprep.subr.bf16.mxu0 0
      %330 = vmatpush1.bf16.msra.mxu0 %v300
      %331 = vmatprep.subr.bf16.mxu0 0
      %332 = vmatpush1.bf16.msra.mxu0 %v301
      %333 = vmatprep.subr.bf16.mxu0 0
      %334 = vmatpush1.bf16.msra.mxu0 %v302
      %335 = vmatprep.subr.bf16.mxu0 0
      %336 = vmatpush1.bf16.msra.mxu0 %v303
      %337 = vmatprep.subr.bf16.mxu0 0
      %338 = vmatpush1.bf16.msra.mxu0 %v304
      %339 = vmatprep.subr.bf16.mxu0 0
      %340 = vmatpush1.bf16.msra.mxu0 %v305
      %341 = vmatprep.subr.bf16.mxu0 0
      %342 = vmatpush1.bf16.msra.mxu0 %v306
      %343 = vmatprep.subr.bf16.mxu0 0
      %344 = vmatpush1.bf16.msra.mxu0 %v307
      %345 = vmatprep.subr.bf16.mxu0 0
      %346 = vmatpush1.bf16.msra.mxu0 %v308
      %347 = vmatprep.subr.bf16.mxu0 0
      %348 = vmatpush1.bf16.msra.mxu0 %v309
      %349 = vmatprep.subr.bf16.mxu0 0
      %350 = vmatpush1.bf16.msra.mxu0 %v310
      %351 = vmatprep.subr.bf16.mxu0 0
      %352 = vmatpush1.bf16.msra.mxu0 0
      %353 = vmatprep.subr.bf16.mxu0 0
      %354 = vmatpush1.bf16.msra.mxu0 0
      %355 = vmatprep.subr.bf16.mxu0 0
      %356 = vmatpush1.bf16.msra.mxu0 0
      %357 = vmatprep.subr.bf16.mxu0 0
      %358 = vmatpush1.bf16.msra.mxu0 0
      %359 = vmatprep.mubr.bf16.mxu0 %v325
      %360 = vmatmul.mubr.bf16.gmra.mrb[0].mxu0 %v248
      %v361 = vpop.f32.mrb[0].mxu0
      %v362 = vadd.f32 %v241, %v361
      %v363 = vpop.f32.mrb[0].mxu0
      %v364 = vpop.f32.mrb[0].mxu0
      %v365 = vadd.f32 %v241, %v364
      %v366 = vpop.f32.mrb[0].mxu0
      %367 = vdwg.mxu0
      %368 = vadd.xlane.f32.xlu0 %v362
      %v369 = vpop.xlane.xlu0 %368
      %370 = vadd.xlane.f32.xlu0 %v365
      %v371 = vpop.xlane.xlu0 %370
      %v372 = vrcp.pop 128.0
      %v373 = vmul.f32 %v369, %v372
      %v374 = vmul.f32 %v371, %v372
      %v375 = vsub.f32 %v362, %v373
      %v376 = vsub.f32 %v365, %v374
      %v377 = vmul.f32 %v375, %v375
      %v378 = vmul.f32 %v376, %v376
      %379 = vadd.xlane.f32.xlu0 %v377
      %v380 = vpop.xlane.xlu0 %379
      %381 = vadd.xlane.f32.xlu0 %v378
      %v382 = vpop.xlane.xlu0 %381
      %v383 = vmul.f32 %v380, %v372
      %v384 = vmul.f32 %v382, %v372
      %v385 = vadd.f32 %v383, 1e-05
      %v386 = vadd.f32 %v384, 1e-05
      %v387 = vrsqrt.pop %v385
      %v388 = vrsqrt.pop %v386
      %v389 = vmul.f32 %v375, %v387
      %v390 = vmul.f32 %v376, %v388
      %v391 = vlaneseq
      %v392 = vshrl.u32 %v391, 7
      %v393 = vsub.s32 1, %v392
      %v394 = vrot.slane %v237, %v393
      %v395 = vmul.f32 %v389, %v394
      %v396 = vmul.f32 %v390, %v394
      %v397 = vlaneseq
      %v398 = vshrl.u32 %v397, 7
      %v399 = vsub.s32 2, %v398
      %v400 = vrot.slane %v237, %v399
      %v401 = vadd.f32 %v395, %v400
      %v402 = vadd.f32 %v396, %v400
      %403 = vxpose.xlu0.b32.start [1/16] %v401, 128
      %404 = vxpose.xlu0.b32.cont [2/16] %v402, 128
      %405 = vxpose.xlu0.b32.cont [3/16] 0.0, 128
      %406 = vxpose.xlu0.b32.cont [4/16] 0.0, 128
      %407 = vxpose.xlu0.b32.cont [5/16] 0.0, 128
      %408 = vxpose.xlu0.b32.cont [6/16] 0.0, 128
      %409 = vxpose.xlu0.b32.cont [7/16] 0.0, 128
      %410 = vxpose.xlu0.b32.cont [8/16] 0.0, 128
      %411 = vxpose.xlu0.b32.cont [9/16] 0.0, 128
      %412 = vxpose.xlu0.b32.cont [10/16] 0.0, 128
      %413 = vxpose.xlu0.b32.cont [11/16] 0.0, 128
      %414 = vxpose.xlu0.b32.cont [12/16] 0.0, 128
      %415 = vxpose.xlu0.b32.cont [13/16] 0.0, 128
      %416 = vxpose.xlu0.b32.cont [14/16] 0.0, 128
      %417 = vxpose.xlu0.b32.cont [15/16] 0.0, 128
      %418 = vxpose.xlu0.b32.end [16/16] 0.0, 128
      %v419 = vpop.trf.xlu0
      %v420 = vpop.trf.xlu0
      %v421 = vpop.trf.xlu0
      %v422 = vpop.trf.xlu0
      %v423 = vpop.trf.xlu0
      %v424 = vpop.trf.xlu0
      %v425 = vpop.trf.xlu0
      %v426 = vpop.trf.xlu0
      %v427 = vpop.trf.xlu0
      %v428 = vpop.trf.xlu0
      %v429 = vpop.trf.xlu0
      %v430 = vpop.trf.xlu0
      %v431 = vpop.trf.xlu0
      %v432 = vpop.trf.xlu0
      %v433 = vpop.trf.xlu0
      %v434 = vpop.trf.xlu0
      %v435 = vpack.c.bf16 %v420, %v419
      %v436 = vpack.c.bf16 %v422, %v421
      %v437 = vpack.c.bf16 %v424, %v423
      %v438 = vpack.c.bf16 %v426, %v425
      %v439 = vpack.c.bf16 %v428, %v427
      %v440 = vpack.c.bf16 %v430, %v429
      %v441 = vpack.c.bf16 %v432, %v431
      %v442 = vpack.c.bf16 %v434, %v433
      %v451 = vunpack.c.l.b16 %v435
      %v452 = vunpack.c.h.b16 %v435
      %v453 = vunpack.c.l.b16 %v436
      %v454 = vunpack.c.h.b16 %v436
      %v455 = vunpack.c.l.b16 %v437
      %v456 = vunpack.c.h.b16 %v437
      %v457 = vunpack.c.l.b16 %v438
      %v458 = vunpack.c.h.b16 %v438
      %v459 = vunpack.c.l.b16 %v439
      %v460 = vunpack.c.h.b16 %v439
      %v461 = vunpack.c.l.b16 %v440
      %v462 = vunpack.c.h.b16 %v440
      %v463 = vunpack.c.l.b16 %v441
      %v464 = vunpack.c.h.b16 %v441
      %v465 = vunpack.c.l.b16 %v442
      %v466 = vunpack.c.h.b16 %v442
      %v467 = vpack.c.b16 %v451, %v451
      %v468 = vpack.c.b16 %v452, %v452
      %v469 = vpack.c.b16 %v453, %v453
      %v470 = vpack.c.b16 %v454, %v454
      %v471 = vpack.c.b16 %v455, %v455
      %v472 = vpack.c.b16 %v456, %v456
      %v473 = vpack.c.b16 %v457, %v457
      %v474 = vpack.c.b16 %v458, %v458
      %v475 = vpack.c.b16 %v459, %v459
      %v476 = vpack.c.b16 %v460, %v460
      %v477 = vpack.c.b16 %v461, %v461
      %v478 = vpack.c.b16 %v462, %v462
      %v479 = vpack.c.b16 %v463, %v463
      %v480 = vpack.c.b16 %v464, %v464
      %v481 = vpack.c.b16 %v465, %v465
      %v482 = vpack.c.b16 %v466, %v466
      %vm499 = vcmask 125952
      %500 = vst.msk [vmem:[%s209] sm:$0xf] %vm499, %v467
      %501 = vst.msk [vmem:[%s209 + $0x4] sm:$0xf] %vm499, %v468
      %502 = vst.msk [vmem:[%s209 + $0x8] sm:$0xf] %vm499, %v469
      %503 = vst.msk [vmem:[%s209 + $0xc] sm:$0xf] %vm499, %v470
      %504 = vst.msk [vmem:[%s209 + $0x10] sm:$0xf] %vm499, %v471
      %505 = vst.msk [vmem:[%s209 + $0x14] sm:$0xf] %vm499, %v472
      %506 = vst.msk [vmem:[%s209 + $0x18] sm:$0xf] %vm499, %v473
      %507 = vst.msk [vmem:[%s209 + $0x1c] sm:$0xf] %vm499, %v474
      %508 = vst.msk [vmem:[%s209 + $0x20] sm:$0xf] %vm499, %v475
      %509 = vst.msk [vmem:[%s209 + $0x24] sm:$0xf] %vm499, %v476
      %510 = vst.msk [vmem:[%s209 + $0x28] sm:$0xf] %vm499, %v477
      %511 = vst.msk [vmem:[%s209 + $0x2c] sm:$0xf] %vm499, %v478
      %512 = vst.msk [vmem:[%s209 + $0x30] sm:$0xf] %vm499, %v479
      %513 = vst.msk [vmem:[%s209 + $0x34] sm:$0xf] %vm499, %v480
      %514 = vst.msk [vmem:[%s209 + $0x38] sm:$0xf] %vm499, %v481
      %515 = vst.msk [vmem:[%s209 + $0x3c] sm:$0xf] %vm499, %v482
      %p516 = scmp.lt.s32.totalorder %s18, 1
      %s517 = scalar_select %p516, %s18, 1
      %p518 = scmp.lt.s32.totalorder %s19, 0
      %s519 = scalar_select %p518, %s19, 0
      %s520 = smul.addr %s517, 16
      %s521 = sadd.s32 %s519, %s520
      %s522 = smul.addr %s521, 4
      %s523 = scalar_lea.vmem %s3, %s522
      // Predicated region
      $region33: #{patch_embed_forward.1} parent=31 // pred_check
        %p524 = pneg %p116
      $region34: #{patch_embed_forward.1} parent=31 // pred_check_branch
        %526 = sbr.rel (%p524) target = $region36
      $region35: #{patch_embed_forward.1} parent=31 // pred_region
        _
      $region36: #{patch_embed_forward.1} parent=31 // pred_fallthru
        _
    $region32: #{patch_embed_forward.1} parent=5 // pred_fallthru
      _
    %p527 = scmp.le.s32.totalorder 2, %s9
    // Predicated region
    $region37: #{patch_embed_forward.1} parent=5 // pred_check
      %p528 = pneg %p527
    $region38: #{patch_embed_forward.1} parent=5 // pred_check_branch
      %530 = sbr.rel (%p528) target = $region40
    $region39: #{patch_embed_forward.1} parent=5 // pred_region
      %s531 = ssub.s32 %s9, 2
      // Predicated region
      $region41: #{patch_embed_forward.1} parent=39 // pred_check
        %p532 = pneg %p122
      $region42: #{patch_embed_forward.1} parent=39 // pred_check_branch
        %534 = sbr.rel (%p532) target = $region44
      $region43: #{patch_embed_forward.1} parent=39 // pred_region
        %p535 = scmp.lt.s32.totalorder %s20, 1
        %s536 = scalar_select %p535, %s20, 1
        %p537 = scmp.lt.s32.totalorder %s21, 0
        %s538 = scalar_select %p537, %s21, 0
        %s539 = smul.addr %s536, 16
        %s540 = sadd.s32 %s538, %s539
        %s541 = smul.addr %s540, 4
        %s542 = scalar_lea.vmem %s3, %s541
      $region44: #{patch_embed_forward.1} parent=39 // pred_fallthru
        _
    $region40: #{patch_embed_forward.1} parent=5 // pred_fallthru
      _
  $region6: #{patch_embed_forward.1} parent=0 // loop_footer
    %s13 = sadd.s32 1, %s9
  $region7: #{patch_embed_forward.1} parent=0 // loop_footer_branch
    %8 = sbr.rel target = $region3
  $region8: #{patch_embed_forward.1} parent=0 // loop_exit
    _

</llo_original>
